<compile_context>
chip_gen: v6e
topology: v6e:2x2x1
jax: 0.10.0
libtpu: 0.0.40
codegen_flags: <defaults>
</compile_context>

<pallas_src>
import functools
import math

import jax
import jax.numpy as jnp
from jax import lax
from jax.experimental import pallas as pl
from jax.experimental.pallas import tpu as pltpu


# --------------------------- VMEM budget helpers ---------------------------

def _vmem_capacity_bytes():
    try:
        return int(pltpu.get_tpu_info().vmem_capacity_bytes)
    except Exception:
        return 64 * 1024 * 1024        # conservative default (v7x per-core VMEM)


def _vmem_limit_bytes():
    # Request ~5/8 of physical VMEM: 40 MiB on v7x (64 MiB physical),
    # 80 MiB on v5e/v6e (128 MiB physical).  Leaves headroom for Mosaic.
    return (_vmem_capacity_bytes() * 5) // 8


# ------------------------------ 'single' mode ------------------------------

def _single_kernel(hre_ref, him_ref, tre_ref, tim_ref, rel_ref, o_ref, *,
                   gamma, phase_scale):
    phase = rel_ref[...].astype(jnp.float32) * phase_scale
    re_r = jnp.cos(phase)
    im_r = jnp.sin(phase)
    re_h = hre_ref[...].astype(jnp.float32)
    im_h = him_ref[...].astype(jnp.float32)
    re_t = tre_ref[...].astype(jnp.float32)
    im_t = tim_ref[...].astype(jnp.float32)
    re_s = re_h * re_r - im_h * im_r - re_t
    im_s = re_h * im_r + im_h * re_r - im_t
    score = jnp.sqrt(re_s * re_s + im_s * im_s)          # (tile, D)
    rows = gamma - jnp.sum(score, axis=-1)               # (tile,)
    # Lane-dense store: (1, tile) block avoids masked narrow stores; the
    # sublane->lane relayout of the row sums rides a free XLU slot.
    o_ref[...] = rows.reshape(1, -1)


def rotate_score_single(re_h, im_h, re_t, im_t, rel, *, gamma, phase_scale):
    """Inputs: 5 x (M, D) planes (storage dtype). Returns (M,) f32 scores."""
    M, D = re_h.shape
    in_bytes = jnp.dtype(re_h.dtype).itemsize
    vmem_limit = _vmem_limit_bytes()
    budget = (vmem_limit * 3) // 4
    # 5 input planes double-buffered + ~8 D-wide f32 temporaries per row.
    per_row = 5 * D * in_bytes * 2 + 8 * D * 4 + 8
    tile = max(1, budget // per_row)
    if tile >= M:
        tile = M
    else:
        tile = min(4096, max(128, (tile // 128) * 128))   # 128-aligned out block

    kernel = functools.partial(_single_kernel, gamma=float(gamma),
                               phase_scale=float(phase_scale))
    out = pl.pallas_call(
        kernel,
        out_shape=jax.ShapeDtypeStruct((1, M), jnp.float32),
        grid_spec=pltpu.PrefetchScalarGridSpec(
            num_scalar_prefetch=0,
            grid=(pl.cdiv(M, tile),),
            in_specs=[pl.BlockSpec((tile, D), lambda i: (i, 0))] * 5,
            out_specs=pl.BlockSpec((1, tile), lambda i: (0, i)),
        ),
        compiler_params=pltpu.CompilerParams(
            dimension_semantics=("parallel",),
            vmem_limit_bytes=vmem_limit),
    )(re_h, im_h, re_t, im_t, rel)
    return out[0]


# ------------------ 'head-batch' / 'tail-batch': fused path ------------------

def _batch_fused_kernel(ids_ref, tre_ref, tim_ref, rotre_ref, rotim_ref,
                        o_ref, gre_ref, gim_ref, *, gamma, nt, n_total,
                        num_entities):
    b = pl.program_id(0)
    base = pl.program_id(1) * nt

    # In-kernel gather of negative-entity rows from the VMEM-resident table
    # into f32 scratch (replaces the jnp.take that round-tripped HBM).
    def gather(i, carry):
        col = jnp.minimum(base + i, n_total - 1)            # clamp ragged tail
        idx = jnp.clip(ids_ref[b, col], 0, num_entities - 1)
        gre_ref[pl.ds(i, 1), :] = tre_ref[pl.ds(idx, 1), :]
        gim_ref[pl.ds(i, 1), :] = tim_ref[pl.ds(idx, 1), :]
        return carry

    lax.fori_loop(0, nt, gather, 0, unroll=nt <= 16)

    rot_re = rotre_ref[0]                                    # (1, D) f32
    rot_im = rotim_ref[0]
    re_s = rot_re - gre_ref[...]                             # (nt, D)
    im_s = rot_im - gim_ref[...]
    score = jnp.sqrt(re_s * re_s + im_s * im_s)
    rows = gamma - jnp.sum(score, axis=-1)                   # (nt,)
    o_ref[...] = rows.reshape(1, 1, -1)                      # lane-dense block


def _batch_scores_fused(rot_re, rot_im, neg_ids, table_re, table_im, *,
                        gamma, vmem_limit, neg_budget):
    B, D = rot_re.shape
    E = table_re.shape[0]
    N = neg_ids.shape[1]
    # gather scratch (2 x f32) + ~3 f32 temporaries per negative row.
    per_neg = 5 * D * 4 + 8
    nt = max(1, neg_budget // per_neg)
    if nt >= N:
        nt = N
    else:
        nt = min(2048, max(128, (nt // 128) * 128))

    kernel = functools.partial(_batch_fused_kernel, gamma=float(gamma), nt=nt,
                               n_total=N, num_entities=E)
    out = pl.pallas_call(
        kernel,
        out_shape=jax.ShapeDtypeStruct((B, 1, N), jnp.float32),
        grid_spec=pltpu.PrefetchScalarGridSpec(
            num_scalar_prefetch=1,
            grid=(B, pl.cdiv(N, nt)),
            in_specs=[
                # Entity table planes: full-extent block, constant index_map
                # -> DMA'd once, then resident in VMEM for the whole grid.
                pl.BlockSpec((E, D), lambda b, n, ids: (0, 0)),
                pl.BlockSpec((E, D), lambda b, n, ids: (0, 0)),
                # Rotated positive entity: resident across the negative axis.
                pl.BlockSpec((1, 1, D), lambda b, n, ids: (b, 0, 0)),
                pl.BlockSpec((1, 1, D), lambda b, n, ids: (b, 0, 0)),
            ],
            out_specs=pl.BlockSpec((1, 1, nt), lambda b, n, ids: (b, 0, n)),
            scratch_shapes=[pltpu.VMEM((nt, D), jnp.float32),
                            pltpu.VMEM((nt, D), jnp.float32)],
        ),
        compiler_params=pltpu.CompilerParams(
            dimension_semantics=("parallel", "parallel"),
            vmem_limit_bytes=vmem_limit),
    )(neg_ids, table_re, table_im, rot_re[:, None, :], rot_im[:, None, :])
    return out[:, 0, :]


# --------------- 'head-batch' / 'tail-batch': dense fallback ---------------

def _batch_dense_kernel(rotre_ref, rotim_ref, negre_ref, negim_ref, o_ref, *,
                        gamma):
    rot_re = rotre_ref[...][:, None, :]                      # (bt, 1, D)
    rot_im = rotim_ref[...][:, None, :]
    re_s = rot_re - negre_ref[...].astype(jnp.float32)       # (bt, nt, D)
    im_s = rot_im - negim_ref[...].astype(jnp.float32)
    score = jnp.sqrt(re_s * re_s + im_s * im_s)
    o_ref[...] = gamma - jnp.sum(score, axis=-1)             # (bt, nt)


def _batch_scores_dense(rot_re, rot_im, neg_re, neg_im, *, gamma, vmem_limit,
                        budget):
    B, N, D = neg_re.shape
    in_bytes = jnp.dtype(neg_re.dtype).itemsize
    bt = B if B < 8 else 8
    per_neg = bt * (2 * D * in_bytes * 2 + 3 * D * 4 + 4)
    nt = max(1, budget // per_neg)
    if nt >= N:
        nt = N
    else:
        nt = min(2048, max(128, (nt // 128) * 128))

    kernel = functools.partial(_batch_dense_kernel, gamma=float(gamma))
    return pl.pallas_call(
        kernel,
        out_shape=jax.ShapeDtypeStruct((B, N), jnp.float32),
        grid_spec=pltpu.PrefetchScalarGridSpec(
            num_scalar_prefetch=0,
            grid=(pl.cdiv(B, bt), pl.cdiv(N, nt)),
            in_specs=[pl.BlockSpec((bt, D), lambda b, n: (b, 0)),
                      pl.BlockSpec((bt, D), lambda b, n: (b, 0)),
                      pl.BlockSpec((bt, nt, D), lambda b, n: (b, n, 0)),
                      pl.BlockSpec((bt, nt, D), lambda b, n: (b, n, 0))],
            out_specs=pl.BlockSpec((bt, nt), lambda b, n: (b, n)),
        ),
        compiler_params=pltpu.CompilerParams(
            dimension_semantics=("parallel", "parallel"),
            vmem_limit_bytes=vmem_limit),
    )(rot_re, rot_im, neg_re, neg_im)


def rotate_score_batch(rot_re, rot_im, neg_ids, entity_re, entity_im, *, gamma):
    """rot_*: (B, D) f32 rotated positive entity; neg_ids: (B, N) int32."""
    B, D = rot_re.shape
    E = entity_re.shape[0]
    N = neg_ids.shape[1]
    vmem_limit = _vmem_limit_bytes()
    budget = (vmem_limit * 3) // 4
    # Resident f32 table (re + im, assume double-buffered) must leave at least
    # half the budget for the per-step gather scratch + temporaries.
    table_bytes = 4 * E * D * 4
    if table_bytes <= budget // 2:
        return _batch_scores_fused(
            rot_re, rot_im, neg_ids,
            entity_re.astype(jnp.float32), entity_im.astype(jnp.float32),
            gamma=gamma, vmem_limit=vmem_limit, neg_budget=budget - table_bytes)
    # TODO(synk): for entity tables too large for VMEM residency the negative
    # gather still materializes (B, N, D) in HBM via XLA; a manual per-row HBM
    # DMA gather (P4) would remove that extra round trip.
    flat = neg_ids.reshape(-1)
    neg_re = jnp.take(entity_re, flat, axis=0).reshape(B, N, D)
    neg_im = jnp.take(entity_im, flat, axis=0).reshape(B, N, D)
    return _batch_scores_dense(rot_re, rot_im, neg_re, neg_im, gamma=gamma,
                               vmem_limit=vmem_limit, budget=budget)


# ------------------------------ Model wrapper ------------------------------

class MyRotatEPallas:
    """Forward-pass semantics of the PyTorch MyRotatE, scored with Pallas."""

    def __init__(self, *, entities_num, relations_num, embedding_dim, gamma,
                 key, param_dtype=jnp.bfloat16):
        self.epsilon = 2.0
        self.gamma = float(gamma)
        self.embedding_dim = embedding_dim
        self.entity_dim = embedding_dim * 2
        self.relation_dim = embedding_dim
        self.embedding_range = (self.gamma + self.epsilon) / embedding_dim

        k1, k2 = jax.random.split(key)
        ent = jax.random.uniform(
            k1, (entities_num, self.entity_dim), jnp.float32,
            minval=-self.embedding_range, maxval=self.embedding_range)
        rel = jax.random.uniform(
            k2, (relations_num, self.relation_dim), jnp.float32,
            minval=-self.embedding_range, maxval=self.embedding_range)
        # Split re/im once (no mid-lane slicing in kernels) and store narrow.
        D = embedding_dim
        self.entity_re = ent[:, :D].astype(param_dtype)
        self.entity_im = ent[:, D:].astype(param_dtype)
        self.relation_embedding = rel.astype(param_dtype)

    def _rotation(self, ent_idx, rel_idx, conj):
        """f32 (B, D) complex rotation of the positive entity by the relation."""
        phase_scale = math.pi / self.embedding_range
        rel = jnp.take(self.relation_embedding, rel_idx, axis=0).astype(jnp.float32)
        phase = rel * phase_scale
        re_r, im_r = jnp.cos(phase), jnp.sin(phase)
        re_p = jnp.take(self.entity_re, ent_idx, axis=0).astype(jnp.float32)
        im_p = jnp.take(self.entity_im, ent_idx, axis=0).astype(jnp.float32)
        if conj:   # head-batch: relation applied to the tail (conjugate form)
            return re_r * re_p + im_r * im_p, re_r * im_p - im_r * re_p
        return re_p * re_r - im_p * im_r, re_p * im_r + im_p * re_r

    def forward(self, sample, mode="single"):
        if mode == "single":
            phase_scale = math.pi / self.embedding_range
            h, r, t = sample[:, 0], sample[:, 1], sample[:, 2]
            score = rotate_score_single(
                jnp.take(self.entity_re, h, axis=0),
                jnp.take(self.entity_im, h, axis=0),
                jnp.take(self.entity_re, t, axis=0),
                jnp.take(self.entity_im, t, axis=0),
                jnp.take(self.relation_embedding, r, axis=0),
                gamma=self.gamma, phase_scale=phase_scale)
            return score[:, None]                              # (B, 1)
        if mode == "head-batch":
            tail_part, head_part = sample
            rot_re, rot_im = self._rotation(tail_part[:, 2], tail_part[:, 1],
                                            conj=True)
            neg_ids = head_part.astype(jnp.int32)
        elif mode == "tail-batch":
            head_part, tail_part = sample
            rot_re, rot_im = self._rotation(head_part[:, 0], head_part[:, 1],
                                            conj=False)
            neg_ids = tail_part.astype(jnp.int32)
        else:
            raise ValueError(mode)
        return rotate_score_batch(rot_re, rot_im, neg_ids,
                                  self.entity_re, self.entity_im,
                                  gamma=self.gamma)             # (B, N)


# --------------------------- Pure-JAX reference ----------------------------

def _reference(model, sample, mode):
    pi = math.pi
    D = model.embedding_dim
    E = jnp.concatenate([model.entity_re, model.entity_im],
                        axis=1).astype(jnp.float32)
    R = model.relation_embedding.astype(jnp.float32)
    if mode == "single":
        head = jnp.take(E, sample[:, 0], axis=0)[:, None, :]
        relation = jnp.take(R, sample[:, 1], axis=0)[:, None, :]
        tail = jnp.take(E, sample[:, 2], axis=0)[:, None, :]
    elif mode == "head-batch":
        tail_part, head_part = sample
        B, N = head_part.shape
        head = jnp.take(E, head_part.reshape(-1), axis=0).reshape(B, N, -1)
        relation = jnp.take(R, tail_part[:, 1], axis=0)[:, None, :]
        tail = jnp.take(E, tail_part[:, 2], axis=0)[:, None, :]
    else:  # tail-batch
        head_part, tail_part = sample
        B, N = tail_part.shape
        head = jnp.take(E, head_part[:, 0], axis=0)[:, None, :]
        relation = jnp.take(R, head_part[:, 1], axis=0)[:, None, :]
        tail = jnp.take(E, tail_part.reshape(-1), axis=0).reshape(B, N, -1)
    re_h, im_h = head[..., :D], head[..., D:]
    re_t, im_t = tail[..., :D], tail[..., D:]
    phase = relation / (model.embedding_range / pi)
    re_r, im_r = jnp.cos(phase), jnp.sin(phase)
    if mode == "head-batch":
        re_s = re_r * re_t + im_r * im_t - re_h
        im_s = re_r * im_t - im_r * re_t - im_h
    else:
        re_s = re_h * re_r - im_h * im_r - re_t
        im_s = re_h * im_r + im_h * re_r - im_t
    score = jnp.sqrt(re_s ** 2 + im_s ** 2)
    return model.gamma - jnp.sum(score, axis=2)


# ---------------------------------- Demo -----------------------------------

if __name__ == "__main__":
    key = jax.random.PRNGKey(0)
    k_model, k_h, k_r, k_t, k_neg = jax.random.split(key, 5)

    entities_num = 64
    relations_num = 16
    embedding_dim = 32
    gamma = 12.0
    batch = 8
    negatives = 4

    model = MyRotatEPallas(
        entities_num=entities_num, relations_num=relations_num,
        embedding_dim=embedding_dim, gamma=gamma, key=k_model)

    heads = jax.random.randint(k_h, (batch,), 0, entities_num)
    rels = jax.random.randint(k_r, (batch,), 0, relations_num)
    tails = jax.random.randint(k_t, (batch,), 0, entities_num)
    triples = jnp.stack([heads, rels, tails], axis=1).astype(jnp.int32)   # (B, 3)
    neg_ents = jax.random.randint(
        k_neg, (batch, negatives), 0, entities_num).astype(jnp.int32)     # (B, N)

    # single mode
    out_single = jax.block_until_ready(model.forward(triples, mode="single"))
    ref_single = _reference(model, triples, "single")
    assert out_single.shape == (batch, 1), out_single.shape
    assert jnp.allclose(out_single, ref_single, atol=3e-3, rtol=3e-3)

    # head-batch mode (fused in-kernel negative gather)
    out_hb = jax.block_until_ready(
        model.forward((triples, neg_ents), mode="head-batch"))
    ref_hb = _reference(model, (triples, neg_ents), "head-batch")
    assert out_hb.shape == (batch, negatives), out_hb.shape
    assert jnp.allclose(out_hb, ref_hb, atol=3e-3, rtol=3e-3)

    # tail-batch mode (fused in-kernel negative gather)
    out_tb = jax.block_until_ready(
        model.forward((triples, neg_ents), mode="tail-batch"))
    ref_tb = _reference(model, (triples, neg_ents), "tail-batch")
    assert out_tb.shape == (batch, negatives), out_tb.shape
    assert jnp.allclose(out_tb, ref_tb, atol=3e-3, rtol=3e-3)

    print("KERNEL_OK")
</pallas_src>

<mosaic_0001>
module attributes {stable_mosaic.version = 11 : i64} {
  func.func @_single_kernel(%arg0: i32, %arg1: memref<8x32xbf16, #tpu.memory_space<vmem>>, %arg2: memref<8x32xbf16, #tpu.memory_space<vmem>>, %arg3: memref<8x32xbf16, #tpu.memory_space<vmem>>, %arg4: memref<8x32xbf16, #tpu.memory_space<vmem>>, %arg5: memref<8x32xbf16, #tpu.memory_space<vmem>>, %arg6: memref<1x8xf32, #tpu.memory_space<vmem>>) attributes {dimension_semantics = [#tpu.dimension_semantics<parallel>], iteration_bounds = array<i64: 1>, scalar_prefetch = 0 : i64, scratch_operands = 0 : i64, tpu.core_type = #tpu.core_type<tc>, window_params = [{transform_indices = @transform_0, window_bounds = array<i64: 8, 32>}, {transform_indices = @transform_1, window_bounds = array<i64: 8, 32>}, {transform_indices = @transform_2, window_bounds = array<i64: 8, 32>}, {transform_indices = @transform_3, window_bounds = array<i64: 8, 32>}, {transform_indices = @transform_4, window_bounds = array<i64: 8, 32>}, {transform_indices = @transform_5, window_bounds = array<i64: 1, 8>}]} {
    %c0 = arith.constant 0 : index
    %c0_0 = arith.constant 0 : index
    %0 = vector.load %arg5[%c0, %c0_0] : memref<8x32xbf16, #tpu.memory_space<vmem>>, vector<8x32xbf16>
    %1 = arith.extf %0 : vector<8x32xbf16> to vector<8x32xf32>
    %cst = arith.constant 7.18078327 : f32
    %2 = vector.broadcast %cst : f32 to vector<8x32xf32>
    %3 = arith.mulf %1, %2 : vector<8x32xf32>
    %4 = math.cos %3 : vector<8x32xf32>
    %5 = math.sin %3 : vector<8x32xf32>
    %c0_1 = arith.constant 0 : index
    %c0_2 = arith.constant 0 : index
    %6 = vector.load %arg1[%c0_1, %c0_2] : memref<8x32xbf16, #tpu.memory_space<vmem>>, vector<8x32xbf16>
    %7 = arith.extf %6 : vector<8x32xbf16> to vector<8x32xf32>
    %c0_3 = arith.constant 0 : index
    %c0_4 = arith.constant 0 : index
    %8 = vector.load %arg2[%c0_3, %c0_4] : memref<8x32xbf16, #tpu.memory_space<vmem>>, vector<8x32xbf16>
    %9 = arith.extf %8 : vector<8x32xbf16> to vector<8x32xf32>
    %c0_5 = arith.constant 0 : index
    %c0_6 = arith.constant 0 : index
    %10 = vector.load %arg3[%c0_5, %c0_6] : memref<8x32xbf16, #tpu.memory_space<vmem>>, vector<8x32xbf16>
    %11 = arith.extf %10 : vector<8x32xbf16> to vector<8x32xf32>
    %c0_7 = arith.constant 0 : index
    %c0_8 = arith.constant 0 : index
    %12 = vector.load %arg4[%c0_7, %c0_8] : memref<8x32xbf16, #tpu.memory_space<vmem>>, vector<8x32xbf16>
    %13 = arith.extf %12 : vector<8x32xbf16> to vector<8x32xf32>
    %14 = arith.mulf %7, %4 : vector<8x32xf32>
    %15 = arith.mulf %9, %5 : vector<8x32xf32>
    %16 = arith.subf %14, %15 : vector<8x32xf32>
    %17 = arith.subf %16, %11 : vector<8x32xf32>
    %18 = arith.mulf %7, %5 : vector<8x32xf32>
    %19 = arith.mulf %9, %4 : vector<8x32xf32>
    %20 = arith.addf %18, %19 : vector<8x32xf32>
    %21 = arith.subf %20, %13 : vector<8x32xf32>
    %22 = arith.mulf %17, %17 : vector<8x32xf32>
    %23 = arith.mulf %21, %21 : vector<8x32xf32>
    %24 = arith.addf %22, %23 : vector<8x32xf32>
    %25 = math.sqrt %24 : vector<8x32xf32>
    %cst_9 = arith.constant dense<0.000000e+00> : vector<8xf32>
    %26 = vector.multi_reduction <add>, %25, %cst_9 [1] : vector<8x32xf32> to vector<8xf32>
    %cst_10 = arith.constant 1.200000e+01 : f32
    %27 = vector.broadcast %cst_10 : f32 to vector<8xf32>
    %28 = arith.subf %27, %26 : vector<8xf32>
    %29 = vector.shape_cast %28 : vector<8xf32> to vector<1x8xf32>
    %c0_11 = arith.constant 0 : index
    %c0_12 = arith.constant 0 : index
    %30 = vector.load %arg6[%c0_11, %c0_12] : memref<1x8xf32, #tpu.memory_space<vmem>>, vector<1x8xf32>
    tpu.vector_store %arg6[%c0_11, %c0_12], %29 {strides = array<i32>} : memref<1x8xf32, #tpu.memory_space<vmem>>, vector<1x8xf32>,
    return
  }
  func.func @transform_0(%arg0: i32) -> (i32, i32) {
    %c0_i32 = arith.constant 0 : i32
    %c0_i32_0 = arith.constant 0 : i32
    return %arg0, %c0_i32 : i32, i32
  }
  func.func @transform_1(%arg0: i32) -> (i32, i32) {
    %c0_i32 = arith.constant 0 : i32
    %c0_i32_0 = arith.constant 0 : i32
    return %arg0, %c0_i32 : i32, i32
  }
  func.func @transform_2(%arg0: i32) -> (i32, i32) {
    %c0_i32 = arith.constant 0 : i32
    %c0_i32_0 = arith.constant 0 : i32
    return %arg0, %c0_i32 : i32, i32
  }
  func.func @transform_3(%arg0: i32) -> (i32, i32) {
    %c0_i32 = arith.constant 0 : i32
    %c0_i32_0 = arith.constant 0 : i32
    return %arg0, %c0_i32 : i32, i32
  }
  func.func @transform_4(%arg0: i32) -> (i32, i32) {
    %c0_i32 = arith.constant 0 : i32
    %c0_i32_0 = arith.constant 0 : i32
    return %arg0, %c0_i32 : i32, i32
  }
  func.func @transform_5(%arg0: i32) -> (i32, i32) {
    %c0_i32 = arith.constant 0 : i32
    %c0_i32_0 = arith.constant 0 : i32
    return %c0_i32, %arg0 : i32, i32
  }
}

</mosaic_0001>

<llo_original>
// kernel: tpu_custom_call.1
$region0: #{tpu_custom_call.1}
  #allocation0 [shape = 'u32[]', space=smem, size = 0x4, offset = 0x4, fixed_abs, tag = 'smem constant byte address 0x4 - core index']
  #allocation1 [shape = 'u32[144,128]{1,0:T(1,128)}', space=vmem, size = 0x12000, scoped, tag = 'internal scratch']
  %s0 = inlined_call_operand.hbm [shape: bf16[8,32], index: 0, kind: input, shape index: {}]
  %s1 = inlined_call_operand.hbm [shape: bf16[8,32], index: 1, kind: input, shape index: {}]
  %s2 = inlined_call_operand.hbm [shape: bf16[8,32], index: 2, kind: input, shape index: {}]
  %s3 = inlined_call_operand.vmem [shape: bf16[8,32], index: 3, kind: input, shape index: {}]
  %s4 = inlined_call_operand.hbm [shape: bf16[8,32], index: 4, kind: input, shape index: {}]
  %s5 = inlined_call_operand.hbm [shape: f32[1,8], index: 5, kind: output, shape index: {}]
  %s6 = sld [smem:[#allocation0]]
  $region46: #{tpu_custom_call.1} parent=0
    _
  %s8 = ssub.s32 1, %s6
  %s9 = scalar_select 0, %s8, %s6
  $region1: #{tpu_custom_call.1} parent=0
    #allocation2 [shape = 'u8[2048]{0}', space=vmem, size = 0x800, scoped, tag = 'input window, operand 0, single buffered']
    #allocation3 [shape = 's32[1]{0}', space=sflag, size = 0x4, scoped, tag = 'scoped memory for tpu_custom_call.1']
    #allocation4 [shape = 's32[1]{0}', space=sflag, size = 0x4, scoped, tag = 'scoped memory for tpu_custom_call.1']
    #allocation5 [shape = 'u8[2048]{0}', space=vmem, size = 0x800, scoped, tag = 'input window, operand 1, single buffered']
    #allocation6 [shape = 's32[1]{0}', space=sflag, size = 0x4, scoped, tag = 'scoped memory for tpu_custom_call.1']
    #allocation7 [shape = 'u8[2048]{0}', space=vmem, size = 0x800, scoped, tag = 'input window, operand 2, single buffered']
    #allocation8 [shape = 'u8[2048]{0}', space=vmem, size = 0x800, scoped, tag = 'input window, operand 4, single buffered']
    #allocation9 [shape = 's32[1]{0}', space=sflag, size = 0x4, scoped, tag = 'scoped memory for tpu_custom_call.1']
    #allocation10 [shape = 'u8[512]{0}', space=vmem, size = 0x400, scoped, tag = 'output window, operand 0, single buffered']
    %10 = vsyncpa [#allocation3], 0
    %11 = vsyncpa [#allocation6], 0
    %12 = vsyncpa [#allocation9], 0
    %13 = vsyncpa [#allocation4], 0
    // Predicated region
    $region2: #{tpu_custom_call.1} parent=1 // pred_check
      _
    $region3: #{tpu_custom_call.1} parent=1 // pred_check_branch
      %15 = sbr.rel (0) target = $region5
    $region4: #{tpu_custom_call.1} parent=1 // pred_region
      %s17 = ssub.s32 64, 64
      %18 = vsyncadd [#allocation3], %s17
      %s20 = sshll.u32 [#allocation2], 4
      %s21 = int_to_ptr.vmem [resolvable:$true] %s20
      %23 = dma.hbm_to_vmem [thread:$0]  %s0, 64, %s21, [#allocation3]
    $region5: #{tpu_custom_call.1} parent=1 // pred_fallthru
      _
    // Predicated region
    $region6: #{tpu_custom_call.1} parent=1 // pred_check
      _
    $region7: #{tpu_custom_call.1} parent=1 // pred_check_branch
      %25 = sbr.rel (0) target = $region9
    $region8: #{tpu_custom_call.1} parent=1 // pred_region
      %s27 = ssub.s32 64, 64
      %28 = vsyncadd [#allocation6], %s27
      %s30 = sshll.u32 [#allocation5], 4
      %s31 = int_to_ptr.vmem [resolvable:$true] %s30
      %33 = dma.hbm_to_vmem [thread:$0]  %s1, 64, %s31, [#allocation6]
    $region9: #{tpu_custom_call.1} parent=1 // pred_fallthru
      _
    // Predicated region
    $region10: #{tpu_custom_call.1} parent=1 // pred_check
      _
    $region11: #{tpu_custom_call.1} parent=1 // pred_check_branch
      %35 = sbr.rel (0) target = $region13
    $region12: #{tpu_custom_call.1} parent=1 // pred_region
      %s37 = ssub.s32 64, 64
      %38 = vsyncadd [#allocation6], %s37
      %s40 = sshll.u32 [#allocation7], 4
      %s41 = int_to_ptr.vmem [resolvable:$true] %s40
      %43 = dma.hbm_to_vmem [thread:$0]  %s2, 64, %s41, [#allocation6]
    $region13: #{tpu_custom_call.1} parent=1 // pred_fallthru
      _
    // Predicated region
    $region14: #{tpu_custom_call.1} parent=1 // pred_check
      _
    $region15: #{tpu_custom_call.1} parent=1 // pred_check_branch
      %45 = sbr.rel (0) target = $region17
    $region16: #{tpu_custom_call.1} parent=1 // pred_region
      _
    $region17: #{tpu_custom_call.1} parent=1 // pred_fallthru
      _
    // Predicated region
    $region18: #{tpu_custom_call.1} parent=1 // pred_check
      _
    $region19: #{tpu_custom_call.1} parent=1 // pred_check_branch
      %47 = sbr.rel (0) target = $region21
    $region20: #{tpu_custom_call.1} parent=1 // pred_region
      %s49 = ssub.s32 64, 64
      %50 = vsyncadd [#allocation9], %s49
      %s52 = sshll.u32 [#allocation8], 4
      %s53 = int_to_ptr.vmem [resolvable:$true] %s52
      %55 = dma.hbm_to_vmem [thread:$0]  %s4, 64, %s53, [#allocation9]
    $region21: #{tpu_custom_call.1} parent=1 // pred_fallthru
      _
    // Predicated region
    $region22: #{tpu_custom_call.1} parent=1 // pred_check
      _
    $region23: #{tpu_custom_call.1} parent=1 // pred_check_branch
      %57 = sbr.rel (0) target = $region25
    $region24: #{tpu_custom_call.1} parent=1 // pred_region
      %58 = dma.done [#allocation3], 64
    $region25: #{tpu_custom_call.1} parent=1 // pred_fallthru
      _
    // Predicated region
    $region26: #{tpu_custom_call.1} parent=1 // pred_check
      _
    $region27: #{tpu_custom_call.1} parent=1 // pred_check_branch
      %60 = sbr.rel (0) target = $region29
    $region28: #{tpu_custom_call.1} parent=1 // pred_region
      %61 = dma.done [#allocation6], 64
    $region29: #{tpu_custom_call.1} parent=1 // pred_fallthru
      _
    // Predicated region
    $region30: #{tpu_custom_call.1} parent=1 // pred_check
      _
    $region31: #{tpu_custom_call.1} parent=1 // pred_check_branch
      %63 = sbr.rel (0) target = $region33
    $region32: #{tpu_custom_call.1} parent=1 // pred_region
      %64 = dma.done [#allocation6], 64
    $region33: #{tpu_custom_call.1} parent=1 // pred_fallthru
      _
    // Predicated region
    $region34: #{tpu_custom_call.1} parent=1 // pred_check
      _
    $region35: #{tpu_custom_call.1} parent=1 // pred_check_branch
      %66 = sbr.rel (0) target = $region37
    $region36: #{tpu_custom_call.1} parent=1 // pred_region
      %67 = dma.done [#allocation9], 64
    $region37: #{tpu_custom_call.1} parent=1 // pred_fallthru
      _
    %v68 = vld [vmem:[#allocation8] sm:$0xf]
    %v69 = vunpack.c.l.bf16 %v68
    %v70 = vmul.f32 %v69, 7.1807833
    %v71 = vand.u32 2147483647, %v70
    %vm72 = vcmp.le.f32.partialorder %v71, 0.7853982
    %vm73 = vcmp.lt.s32.totalorder %v70, 0
    %v74 = vand.u32 %v70, 2139095040
    %v75 = vshrl.u32 %v74, 23
    %v76 = vsub.s32 %v75, 127
    %v77 = vand.u32 2147483647, %v70
    %v78 = vand.u32 %v77, 8388607
    %v79 = vor.u32 %v78, 8388608
    %v80 = vsub.s32 0, %v79
    %v81 = vadd.s32 %v76, 1
    %vm82 = vcmp.gt.s32.totalorder %v81, 0
    %v83 = vsel %vm82, %v81, 0
    %v84 = vshrl.u32 %v83, 5
    %v85 = vand.u32 %v83, 31
    %v86 = vsub.s32 32, %v85
    %v87 = vshrl.u32 683565275, %v86
    %v88 = vshll.u32 683565275, %v85
    %v89 = vshrl.u32 2475754826, %v86
    %v90 = vor.u32 %v88, %v89
    %v91 = vshll.u32 2475754826, %v85
    %v92 = vshrl.u32 2131351028, %v86
    %v93 = vor.u32 %v91, %v92
    %v94 = vshll.u32 2131351028, %v85
    %v95 = vshrl.u32 2102212464, %v86
    %v96 = vor.u32 %v94, %v95
    %v97 = vshll.u32 2102212464, %v85
    %v98 = vshrl.u32 920167782, %v86
    %v99 = vor.u32 %v97, %v98
    %v100 = vshll.u32 920167782, %v85
    %v101 = vshrl.u32 1326507024, %v86
    %v102 = vor.u32 %v100, %v101
    %vm103 = vcmp.lt.s32.totalorder %v84, 1
    %vm104 = vcmp.lt.s32.totalorder %v84, 2
    %vm105 = vcmp.lt.s32.totalorder %v84, 3
    %vm106 = vcmp.lt.s32.totalorder %v84, 4
    %v107 = vsel %vm103, %v87, %v90
    %v108 = vsel %vm106, %v96, 2102212464
    %v109 = vsel %vm105, %v93, %v108
    %v110 = vsel %vm104, %v107, %v109
    %v111 = vsel %vm103, %v90, %v93
    %v112 = vsel %vm106, %v99, 920167782
    %v113 = vsel %vm105, %v96, %v112
    %v114 = vsel %vm104, %v111, %v113
    %v115 = vsel %vm103, %v93, %v96
    %v116 = vsel %vm106, %v102, 1326507024
    %v117 = vsel %vm105, %v99, %v116
    %v118 = vsel %vm104, %v115, %v117
    %v119 = vshll.u32 %v79, 8
    %v120 = vmul.u32.u64.compose %v119, %v118
    %v121 = vextract.low.u32 %v120
    %v122 = vextract.high.u32 %v120
    %v123 = vmul.u32.u64.compose %v119, %v114
    %v124 = vextract.low.u32 %v123
    %v125 = vextract.high.u32 %v123
    %v126 = vmul.u32 %v119, %v110
    %v127 = vadd.s32 %v122, %v124
    %vm128 = vc.u32 %v122, %v124
    %v129 = vadd.s32 %v125, 1
    %v130 = vsel %vm128, %v129, %v125
    %v131 = vadd.s32 %v126, %v130
    %v132 = vadd.s32 %v131, 536870912
    %v133 = vshrl.u32 %v132, 30
    %v134 = vshll.u32 %v133, 30
    %v135 = vsub.s32 %v131, %v134
    %vm136 = vcmp.lt.s32.totalorder %v135, 0
    %v137 = vsub.s32 0, %v135
    %v138 = vsel %vm136, %v137, %v135
    %v139 = vclz %v138
    %v140 = vsub.s32 %v139, 2
    %vm141 = vcmp.gt.s32.totalorder 0, %v140
    %v142 = vsel %vm141, 0, %v140
    %v143 = vsub.s32 32, %v142
    %v144 = vshll.u32 %v135, %v142
    %v145 = vshrl.u32 %v127, %v143
    %v146 = vor.u32 %v144, %v145
    %v147 = vsub.s32 4294967266, %v142
    %v148 = vadd.s32 %v147, 127
    %v149 = vshll.u32 %v148, 23
    %v150 = vor.u32 4788187, %v149
    %v151 = vand.u32 2147483647, %v150
    %v153 = vcvt.s32.f32 %v146
    %v154 = vmul.f32 %v153, %v151
    %v155 = vxor.u32 %v154, 2147483648
    %v156 = vsel %vm73, %v155, %v154
    %v157 = vsub.s32 4, %v133
    %v158 = vsel %vm73, %v157, %v133
    %v159 = vsel %vm72, %v70, %v156
    %v160 = vsel %vm72, 0, %v158
    %v161 = vcosq.f32.pop %v159
    %v162 = vsinq.f32.pop %v159
    %vm163 = vweird.f32 %v70
    %v164 = vand.u32 %v160, 3
    %vm165 = vcmp.lt.s32.totalorder %v164, 2
    %vm166 = vcmp.eq.s32.totalorder %v164, 0
    %v167 = vxor.u32 %v162, 2147483648
    %v168 = vsel %vm166, %v161, %v167
    %vm169 = vcmp.eq.s32.totalorder %v164, 2
    %v170 = vxor.u32 %v161, 2147483648
    %v171 = vsel %vm169, %v170, %v162
    %v172 = vsel %vm165, %v168, %v171
    %v173 = vsel %vm163, nan, %v172
    %v174 = vand.u32 2147483647, %v70
    %vm175 = vcmp.le.f32.partialorder %v174, 0.7853982
    %vm176 = vcmp.lt.s32.totalorder %v70, 0
    %v177 = vand.u32 %v70, 2139095040
    %v178 = vshrl.u32 %v177, 23
    %v179 = vsub.s32 %v178, 127
    %v180 = vand.u32 2147483647, %v70
    %v181 = vand.u32 %v180, 8388607
    %v182 = vor.u32 %v181, 8388608
    %v183 = vsub.s32 0, %v182
    %v184 = vadd.s32 %v179, 1
    %vm185 = vcmp.gt.s32.totalorder %v184, 0
    %v186 = vsel %vm185, %v184, 0
    %v187 = vshrl.u32 %v186, 5
    %v188 = vand.u32 %v186, 31
    %v189 = vsub.s32 32, %v188
    %v190 = vshrl.u32 683565275, %v189
    %v191 = vshll.u32 683565275, %v188
    %v192 = vshrl.u32 2475754826, %v189
    %v193 = vor.u32 %v191, %v192
    %v194 = vshll.u32 2475754826, %v188
    %v195 = vshrl.u32 2131351028, %v189
    %v196 = vor.u32 %v194, %v195
    %v197 = vshll.u32 2131351028, %v188
    %v198 = vshrl.u32 2102212464, %v189
    %v199 = vor.u32 %v197, %v198
    %v200 = vshll.u32 2102212464, %v188
    %v201 = vshrl.u32 920167782, %v189
    %v202 = vor.u32 %v200, %v201
    %v203 = vshll.u32 920167782, %v188
    %v204 = vshrl.u32 1326507024, %v189
    %v205 = vor.u32 %v203, %v204
    %vm206 = vcmp.lt.s32.totalorder %v187, 1
    %vm207 = vcmp.lt.s32.totalorder %v187, 2
    %vm208 = vcmp.lt.s32.totalorder %v187, 3
    %vm209 = vcmp.lt.s32.totalorder %v187, 4
    %v210 = vsel %vm206, %v190, %v193
    %v211 = vsel %vm209, %v199, 2102212464
    %v212 = vsel %vm208, %v196, %v211
    %v213 = vsel %vm207, %v210, %v212
    %v214 = vsel %vm206, %v193, %v196
    %v215 = vsel %vm209, %v202, 920167782
    %v216 = vsel %vm208, %v199, %v215
    %v217 = vsel %vm207, %v214, %v216
    %v218 = vsel %vm206, %v196, %v199
    %v219 = vsel %vm209, %v205, 1326507024
    %v220 = vsel %vm208, %v202, %v219
    %v221 = vsel %vm207, %v218, %v220
    %v222 = vshll.u32 %v182, 8
    %v223 = vmul.u32.u64.compose %v222, %v221
    %v224 = vextract.low.u32 %v223
    %v225 = vextract.high.u32 %v223
    %v226 = vmul.u32.u64.compose %v222, %v217
    %v227 = vextract.low.u32 %v226
    %v228 = vextract.high.u32 %v226
    %v229 = vmul.u32 %v222, %v213
    %v230 = vadd.s32 %v225, %v227
    %vm231 = vc.u32 %v225, %v227
    %v232 = vadd.s32 %v228, 1
    %v233 = vsel %vm231, %v232, %v228
    %v234 = vadd.s32 %v229, %v233
    %v235 = vadd.s32 %v234, 536870912
    %v236 = vshrl.u32 %v235, 30
    %v237 = vshll.u32 %v236, 30
    %v238 = vsub.s32 %v234, %v237
    %vm239 = vcmp.lt.s32.totalorder %v238, 0
    %v240 = vsub.s32 0, %v238
    %v241 = vsel %vm239, %v240, %v238
    %v242 = vclz %v241
    %v243 = vsub.s32 %v242, 2
    %vm244 = vcmp.gt.s32.totalorder 0, %v243
    %v245 = vsel %vm244, 0, %v243
    %v246 = vsub.s32 32, %v245
    %v247 = vshll.u32 %v238, %v245
    %v248 = vshrl.u32 %v230, %v246
    %v249 = vor.u32 %v247, %v248
    %v250 = vsub.s32 4294967266, %v245
    %v251 = vadd.s32 %v250, 127
    %v252 = vshll.u32 %v251, 23
    %v253 = vor.u32 4788187, %v252
    %v254 = vand.u32 2147483647, %v253
    %v256 = vcvt.s32.f32 %v249
    %v257 = vmul.f32 %v256, %v254
    %v258 = vxor.u32 %v257, 2147483648
    %v259 = vsel %vm176, %v258, %v257
    %v260 = vsub.s32 4, %v236
    %v261 = vsel %vm176, %v260, %v236
    %v262 = vsel %vm175, %v70, %v259
    %v263 = vsel %vm175, 0, %v261
    %v264 = vcosq.f32.pop %v262
    %v265 = vsinq.f32.pop %v262
    %vm266 = vweird.f32 %v70
    %v267 = vadd.s32 %v263, 3
    %v268 = vand.u32 %v267, 3
    %vm269 = vcmp.lt.s32.totalorder %v268, 2
    %vm270 = vcmp.eq.s32.totalorder %v268, 0
    %v271 = vxor.u32 %v265, 2147483648
    %v272 = vsel %vm270, %v264, %v271
    %vm273 = vcmp.eq.s32.totalorder %v268, 2
    %v274 = vxor.u32 %v264, 2147483648
    %v275 = vsel %vm273, %v274, %v265
    %v276 = vsel %vm269, %v272, %v275
    %v277 = vsel %vm266, nan, %v276
    %v278 = vld [vmem:[#allocation2] sm:$0xf]
    %v279 = vunpack.c.l.bf16 %v278
    %v280 = vld [vmem:[#allocation5] sm:$0xf]
    %v281 = vunpack.c.l.bf16 %v280
    %v282 = vld [vmem:[#allocation7] sm:$0xf]
    %v283 = vunpack.c.l.bf16 %v282
    %v284 = vld [vmem:[%s3] sm:$0xf]
    %v285 = vunpack.c.l.bf16 %v284
    %v286 = vmul.f32 %v279, %v173
    %v287 = vmul.f32 %v281, %v277
    %v288 = vsub.f32 %v286, %v287
    %v289 = vsub.f32 %v288, %v283
    %v290 = vmul.f32 %v279, %v277
    %v291 = vmul.f32 %v281, %v173
    %v292 = vadd.f32 %v290, %v291
    %v293 = vsub.f32 %v292, %v285
    %v294 = vmul.f32 %v289, %v289
    %v295 = vmul.f32 %v293, %v293
    %v296 = vadd.f32 %v294, %v295
    %v297 = vrsqrt.pop %v296
    %v298 = vmul.f32 %v296, %v297
    %vm299 = vcmp.eq.f32.partialorder %v296, inf
    %v300 = vsel %vm299, %v296, %v298
    %vm301 = vcmp.eq.f32.partialorder %v296, 0.0
    %v302 = vand.u32 %v296, 2147483648
    %v303 = vsel %vm301, %v302, %v300
    %vm304 = vcmask 261120
    %v305 = vsel %vm304, %v303, 0.0
    %306 = vadd.xlane.f32.xlu0 %v305
    %v307 = vpop.xlane.xlu0 %306
    %v308 = vsub.f32 12.0, %v307
    %v310 = vlaneseq
    %v311 = vand.u32 %v310, 127
    %v312 = vlaneseq
    %v313 = vshrl.u32 %v312, 7
    %v314 = vsub.s32 %v311, %v313
    %v315 = vrot.slane %v308, %v314
    %vm317 = vcmask 57344
    %318 = vst.msk [vmem:[#allocation10] sm:$0x1] %vm317, %v315
    // Predicated region
    $region38: #{tpu_custom_call.1} parent=1 // pred_check
      _
    $region39: #{tpu_custom_call.1} parent=1 // pred_check_branch
      %320 = sbr.rel (0) target = $region41
    $region40: #{tpu_custom_call.1} parent=1 // pred_region
      %s322 = ssub.s32 16, 16
      %323 = vsyncadd [#allocation4], %s322
      %s325 = sshll.u32 [#allocation10], 4
      %s326 = int_to_ptr.vmem [resolvable:$true] %s325
      %328 = dma.vmem_to_hbm [thread:$0]  %s326, 16, %s5, [#allocation4]
    $region41: #{tpu_custom_call.1} parent=1 // pred_fallthru
      _
    // Predicated region
    $region42: #{tpu_custom_call.1} parent=1 // pred_check
      _
    $region43: #{tpu_custom_call.1} parent=1 // pred_check_branch
      %330 = sbr.rel (0) target = $region45
    $region44: #{tpu_custom_call.1} parent=1 // pred_region
      %331 = dma.done [#allocation4], 16
    $region45: #{tpu_custom_call.1} parent=1 // pred_fallthru
      _
    %332 = vsyncpa [#allocation3], 1
    %333 = vsyncpa [#allocation6], 1
    %334 = vsyncpa [#allocation9], 1
    %335 = vsyncpa [#allocation4], 1

</llo_original>
